<compile_context>
chip_gen: v7x
topology: tpu7x:2x2x1
jax: 0.10.0
libtpu: 0.0.40
codegen_flags: <defaults>
</compile_context>

<pallas_src>
import functools

import jax
import jax.numpy as jnp
from jax.experimental import pallas as pl
from jax.experimental.pallas import tpu as pltpu

_LANE = 128
_SUBLANE = 8


def _round_up(n: int, m: int) -> int:
    return ((n + m - 1) // m) * m


def _pad2d(a, rows: int, cols: int):
    pr, pc = rows - a.shape[0], cols - a.shape[1]
    if pr == 0 and pc == 0:
        return a
    return jnp.pad(a, ((0, pr), (0, pc)))


def dqn_mlp_kernel(x_ref, w1_ref, b1_ref, w2_ref, b2_ref, w3_ref, b3_ref, o_ref):
    """Fused 3-layer MLP on one (TB, obs) activation tile.

    Weights/biases are VMEM-resident full-array blocks (constant index_map, so
    they are DMA'd once and reused across grid steps). All matmuls accumulate
    in f32 on the MXU; matmul inputs may be bf16. Biases / ReLU stay f32.
    """
    cdt = w1_ref.dtype
    x = x_ref[...]

    # Layer 1: Linear + ReLU
    h1 = jnp.dot(x, w1_ref[...], preferred_element_type=jnp.float32) + b1_ref[...]
    h1 = jnp.maximum(h1, 0.0).astype(cdt)

    # Layer 2: Linear + ReLU
    h2 = jnp.dot(h1, w2_ref[...], preferred_element_type=jnp.float32) + b2_ref[...]
    h2 = jnp.maximum(h2, 0.0).astype(cdt)

    # Layer 3: Linear (Q-values), dense lane-padded store
    q = jnp.dot(h2, w3_ref[...], preferred_element_type=jnp.float32) + b3_ref[...]
    o_ref[...] = q.astype(o_ref.dtype)


def prepare_dqn_params(params, compute_dtype=jnp.bfloat16):
    """One-time weight padding/casting (hoisted out of the jitted forward).

    Hidden / action dims are padded to multiples of 128 (lane-dense); the
    observation (K of the first matmul) is NOT padded. Weight matrices are
    cast to `compute_dtype` (bf16 default); biases stay f32 since they are
    added after the f32 accumulation.
    """
    obs, h1 = params["w1"].shape
    h2 = params["w2"].shape[1]
    A = params["w3"].shape[1]
    h1_p = _round_up(h1, _LANE)
    h2_p = _round_up(h2, _LANE)
    A_p = _round_up(A, _LANE)
    return {
        "w1": _pad2d(params["w1"], obs, h1_p).astype(compute_dtype),
        "b1": _pad2d(params["b1"], 1, h1_p).astype(jnp.float32),
        "w2": _pad2d(params["w2"], h1_p, h2_p).astype(compute_dtype),
        "b2": _pad2d(params["b2"], 1, h2_p).astype(jnp.float32),
        "w3": _pad2d(params["w3"], h2_p, A_p).astype(compute_dtype),
        "b3": _pad2d(params["b3"], 1, A_p).astype(jnp.float32),
    }


def _choose_batch_tile(B: int, cap: int):
    """Pick the batch tile TB and padded batch B_p.

    Big tiles amortize the ~0.35 us per-grid-step pipeline overhead; keep at
    least 2 grid steps when the batch allows it so dimension_semantics=
    ("parallel",) can shard across v7x's two TensorCores.
    """
    B_sub = _round_up(B, _SUBLANE)
    n_steps = max(-(-B_sub // cap), 1)
    if n_steps == 1 and B_sub >= 2 * _SUBLANE:
        n_steps = 2
    tb = _round_up(-(-B_sub // n_steps), _SUBLANE)
    b_pad = _round_up(B_sub, tb)
    return tb, b_pad


@functools.partial(jax.jit,
                   static_argnames=("action_space", "block_batch", "out_dtype"))
def dqn_forward(x, prepared, *, action_space: int, block_batch: int = 2048,
                out_dtype=jnp.bfloat16):
    """Fused DQN forward pass.

    x:        (B, obs) float32
    prepared: output of prepare_dqn_params (padded / casted weights)
    returns   (B, action_space) array of dtype `out_dtype`.
    """
    B, obs = x.shape
    w1, b1 = prepared["w1"], prepared["b1"]
    w2, b2 = prepared["w2"], prepared["b2"]
    w3, b3 = prepared["w3"], prepared["b3"]
    assert w1.shape[0] == obs, "prepared w1 K-dim must match x observation dim"

    compute_dtype = w1.dtype
    h1_p, h2_p, A_p = w1.shape[1], w2.shape[1], w3.shape[1]

    TB, B_p = _choose_batch_tile(B, block_batch)

    xp = x.astype(compute_dtype)
    if B_p != B:
        xp = jnp.pad(xp, ((0, B_p - B), (0, 0)))

    grid = (B_p // TB,)

    # Weights/biases map to block (0, 0) every step -> VMEM-resident, no re-DMA.
    resident = lambda shape: pl.BlockSpec(shape, lambda i: (0, 0))

    # Explicit VMEM budget only if we'd exceed the small scoped defaults
    # (16 MiB on v5e, 32 MiB on v6e/v7x); relevant when block_batch is pushed
    # very high. Footprint: double-buffered x/out tiles + resident weights +
    # f32 h1/h2/q temporaries.
    cbytes = jnp.dtype(compute_dtype).itemsize
    obytes = jnp.dtype(out_dtype).itemsize
    vmem_needed = (
        2 * TB * obs * cbytes
        + 2 * TB * A_p * obytes
        + 2 * (obs * h1_p + h1_p * h2_p + h2_p * A_p) * cbytes
        + 2 * (h1_p + h2_p + A_p) * 4
        + 3 * TB * max(h1_p, h2_p, A_p) * 4
    )
    compiler_kwargs = {"dimension_semantics": ("parallel",)}
    if vmem_needed > 12 * 1024 * 1024:
        compiler_kwargs["vmem_limit_bytes"] = min(int(1.5 * vmem_needed),
                                                  48 * 1024 * 1024)

    out_padded = pl.pallas_call(
        dqn_mlp_kernel,
        out_shape=jax.ShapeDtypeStruct((B_p, A_p), out_dtype),
        grid=grid,
        in_specs=[
            pl.BlockSpec((TB, obs), lambda i: (i, 0)),     # x tile (obs unpadded)
            resident((obs, h1_p)),                         # w1
            resident((1, h1_p)),                           # b1
            resident((h1_p, h2_p)),                        # w2
            resident((1, h2_p)),                           # b2
            resident((h2_p, A_p)),                         # w3
            resident((1, A_p)),                            # b3
        ],
        out_specs=pl.BlockSpec((TB, A_p), lambda i: (i, 0)),
        compiler_params=pltpu.CompilerParams(**compiler_kwargs),
    )(xp, w1, b1, w2, b2, w3, b3)

    # Strip batch and lane padding outside the kernel.
    return out_padded[:B, :action_space]


def init_dqn_params(key, observation_space, action_space,
                    hidden_dim_1=128, hidden_dim_2=128):
    """Deterministic synthetic init (uniform, PyTorch-Linear-like scale)."""
    ks = jax.random.split(key, 6)

    def linear(kw, kb, fan_in, fan_out):
        bound = 1.0 / jnp.sqrt(fan_in)
        w = jax.random.uniform(kw, (fan_in, fan_out), jnp.float32, -bound, bound)
        b = jax.random.uniform(kb, (1, fan_out), jnp.float32, -bound, bound)
        return w, b

    w1, b1 = linear(ks[0], ks[1], observation_space, hidden_dim_1)
    w2, b2 = linear(ks[2], ks[3], hidden_dim_1, hidden_dim_2)
    w3, b3 = linear(ks[4], ks[5], hidden_dim_2, action_space)
    return {"w1": w1, "b1": b1, "w2": w2, "b2": b2, "w3": w3, "b3": b3}


def dqn_reference(x, p):
    """Pure-JAX reference for correctness check."""
    h1 = jnp.maximum(x @ p["w1"] + p["b1"], 0.0)
    h2 = jnp.maximum(h1 @ p["w2"] + p["b2"], 0.0)
    return h2 @ p["w3"] + p["b3"]


if __name__ == "__main__":
    # Small, module-consistent shapes: batch=2 flat observations of dim 32,
    # hidden dims 128/128 (module defaults), action_space=8.
    batch = 2
    observation_space = 32
    action_space = 8

    key = jax.random.PRNGKey(0)
    k_params, k_x = jax.random.split(key)

    params = init_dqn_params(k_params, observation_space, action_space)
    x = jax.random.normal(k_x, (batch, observation_space), jnp.float32)

    q_ref = dqn_reference(x, params)

    # f32 matmul-input + f32 output path: bit-tight check.
    prep_f32 = prepare_dqn_params(params, compute_dtype=jnp.float32)
    q = dqn_forward(x, prep_f32, action_space=action_space, out_dtype=jnp.float32)
    q = jax.block_until_ready(q)
    assert q.shape == (batch, action_space)
    assert jnp.allclose(q, q_ref, atol=1e-5, rtol=1e-5)

    # bf16 fast path (default): bf16 matmul inputs + bf16 output, f32 accumulation.
    prep_bf16 = prepare_dqn_params(params)   # bf16 weights
    q_bf16 = dqn_forward(x, prep_bf16, action_space=action_space)
    q_bf16 = jax.block_until_ready(q_bf16)
    assert q_bf16.shape == (batch, action_space)
    assert q_bf16.dtype == jnp.bfloat16
    assert jnp.allclose(q_bf16.astype(jnp.float32), q_ref, atol=1e-1, rtol=1e-1)

    print("KERNEL_OK")
</pallas_src>

<mosaic_0001>
module attributes {stable_mosaic.version = 11 : i64} {
  func.func @dqn_mlp_kernel(%arg0: i32, %arg1: memref<8x32xf32, #tpu.memory_space<vmem>>, %arg2: memref<32x128xf32, #tpu.memory_space<vmem>>, %arg3: memref<1x128xf32, #tpu.memory_space<vmem>>, %arg4: memref<128x128xf32, #tpu.memory_space<vmem>>, %arg5: memref<1x128xf32, #tpu.memory_space<vmem>>, %arg6: memref<128x128xf32, #tpu.memory_space<vmem>>, %arg7: memref<1x128xf32, #tpu.memory_space<vmem>>, %arg8: memref<8x128xf32, #tpu.memory_space<vmem>>) attributes {dimension_semantics = [#tpu.dimension_semantics<parallel>], iteration_bounds = array<i64: 1>, scalar_prefetch = 0 : i64, scratch_operands = 0 : i64, tpu.core_type = #tpu.core_type<tc>, window_params = [{transform_indices = @transform_0, window_bounds = array<i64: 8, 32>}, {pipeline_mode = #tpu.pipeline_mode<synchronous>, transform_indices = @transform_1, window_bounds = array<i64: 32, 128>}, {pipeline_mode = #tpu.pipeline_mode<synchronous>, transform_indices = @transform_2, window_bounds = array<i64: 1, 128>}, {pipeline_mode = #tpu.pipeline_mode<synchronous>, transform_indices = @transform_3, window_bounds = array<i64: 128, 128>}, {pipeline_mode = #tpu.pipeline_mode<synchronous>, transform_indices = @transform_4, window_bounds = array<i64: 1, 128>}, {pipeline_mode = #tpu.pipeline_mode<synchronous>, transform_indices = @transform_5, window_bounds = array<i64: 128, 128>}, {pipeline_mode = #tpu.pipeline_mode<synchronous>, transform_indices = @transform_6, window_bounds = array<i64: 1, 128>}, {transform_indices = @transform_7, window_bounds = array<i64: 8, 128>}]} {
    %c0 = arith.constant 0 : index
    %c0_0 = arith.constant 0 : index
    %0 = vector.load %arg1[%c0, %c0_0] : memref<8x32xf32, #tpu.memory_space<vmem>>, vector<8x32xf32>
    %c0_1 = arith.constant 0 : index
    %c0_2 = arith.constant 0 : index
    %1 = vector.load %arg2[%c0_1, %c0_2] : memref<32x128xf32, #tpu.memory_space<vmem>>, vector<32x128xf32>
    %cst = arith.constant dense<0.000000e+00> : vector<8x128xf32>
    %2 = tpu.matmul %0, %1, %cst {dimension_numbers = #tpu.dot_dimension_numbers<[1], [0], [0], [1], [0, 0, 1, 1], [], []>} : vector<8x32xf32>, vector<32x128xf32>, vector<8x128xf32> -> vector<8x128xf32>
    %c0_3 = arith.constant 0 : index
    %c0_4 = arith.constant 0 : index
    %3 = vector.load %arg3[%c0_3, %c0_4] : memref<1x128xf32, #tpu.memory_space<vmem>>, vector<1x128xf32>
    %4 = vector.broadcast %3 : vector<1x128xf32> to vector<8x128xf32>
    %5 = arith.addf %2, %4 : vector<8x128xf32>
    %cst_5 = arith.constant 0.000000e+00 : f32
    %6 = vector.broadcast %cst_5 : f32 to vector<8x128xf32>
    %7 = arith.maximumf %5, %6 : vector<8x128xf32>
    %c0_6 = arith.constant 0 : index
    %c0_7 = arith.constant 0 : index
    %8 = vector.load %arg4[%c0_6, %c0_7] : memref<128x128xf32, #tpu.memory_space<vmem>>, vector<128x128xf32>
    %cst_8 = arith.constant dense<0.000000e+00> : vector<8x128xf32>
    %9 = tpu.matmul %7, %8, %cst_8 {dimension_numbers = #tpu.dot_dimension_numbers<[1], [0], [0], [1], [0, 0, 1, 1], [], []>} : vector<8x128xf32>, vector<128x128xf32>, vector<8x128xf32> -> vector<8x128xf32>
    %c0_9 = arith.constant 0 : index
    %c0_10 = arith.constant 0 : index
    %10 = vector.load %arg5[%c0_9, %c0_10] : memref<1x128xf32, #tpu.memory_space<vmem>>, vector<1x128xf32>
    %11 = vector.broadcast %10 : vector<1x128xf32> to vector<8x128xf32>
    %12 = arith.addf %9, %11 : vector<8x128xf32>
    %cst_11 = arith.constant 0.000000e+00 : f32
    %13 = vector.broadcast %cst_11 : f32 to vector<8x128xf32>
    %14 = arith.maximumf %12, %13 : vector<8x128xf32>
    %c0_12 = arith.constant 0 : index
    %c0_13 = arith.constant 0 : index
    %15 = vector.load %arg6[%c0_12, %c0_13] : memref<128x128xf32, #tpu.memory_space<vmem>>, vector<128x128xf32>
    %cst_14 = arith.constant dense<0.000000e+00> : vector<8x128xf32>
    %16 = tpu.matmul %14, %15, %cst_14 {dimension_numbers = #tpu.dot_dimension_numbers<[1], [0], [0], [1], [0, 0, 1, 1], [], []>} : vector<8x128xf32>, vector<128x128xf32>, vector<8x128xf32> -> vector<8x128xf32>
    %c0_15 = arith.constant 0 : index
    %c0_16 = arith.constant 0 : index
    %17 = vector.load %arg7[%c0_15, %c0_16] : memref<1x128xf32, #tpu.memory_space<vmem>>, vector<1x128xf32>
    %18 = vector.broadcast %17 : vector<1x128xf32> to vector<8x128xf32>
    %19 = arith.addf %16, %18 : vector<8x128xf32>
    %c0_17 = arith.constant 0 : index
    %c0_18 = arith.constant 0 : index
    %20 = vector.load %arg8[%c0_17, %c0_18] : memref<8x128xf32, #tpu.memory_space<vmem>>, vector<8x128xf32>
    tpu.vector_store %arg8[%c0_17, %c0_18], %19 {strides = array<i32>} : memref<8x128xf32, #tpu.memory_space<vmem>>, vector<8x128xf32>,
    return
  }
  func.func @transform_0(%arg0: i32) -> (i32, i32) {
    %c0_i32 = arith.constant 0 : i32
    %c0_i32_0 = arith.constant 0 : i32
    return %arg0, %c0_i32 : i32, i32
  }
  func.func @transform_1(%arg0: i32) -> (i32, i32) {
    %c0_i32 = arith.constant 0 : i32
    %c0_i32_0 = arith.constant 0 : i32
    %c0_i32_1 = arith.constant 0 : i32
    return %c0_i32, %c0_i32_0 : i32, i32
  }
  func.func @transform_2(%arg0: i32) -> (i32, i32) {
    %c0_i32 = arith.constant 0 : i32
    %c0_i32_0 = arith.constant 0 : i32
    %c0_i32_1 = arith.constant 0 : i32
    return %c0_i32, %c0_i32_0 : i32, i32
  }
  func.func @transform_3(%arg0: i32) -> (i32, i32) {
    %c0_i32 = arith.constant 0 : i32
    %c0_i32_0 = arith.constant 0 : i32
    %c0_i32_1 = arith.constant 0 : i32
    return %c0_i32, %c0_i32_0 : i32, i32
  }
  func.func @transform_4(%arg0: i32) -> (i32, i32) {
    %c0_i32 = arith.constant 0 : i32
    %c0_i32_0 = arith.constant 0 : i32
    %c0_i32_1 = arith.constant 0 : i32
    return %c0_i32, %c0_i32_0 : i32, i32
  }
  func.func @transform_5(%arg0: i32) -> (i32, i32) {
    %c0_i32 = arith.constant 0 : i32
    %c0_i32_0 = arith.constant 0 : i32
    %c0_i32_1 = arith.constant 0 : i32
    return %c0_i32, %c0_i32_0 : i32, i32
  }
  func.func @transform_6(%arg0: i32) -> (i32, i32) {
    %c0_i32 = arith.constant 0 : i32
    %c0_i32_0 = arith.constant 0 : i32
    %c0_i32_1 = arith.constant 0 : i32
    return %c0_i32, %c0_i32_0 : i32, i32
  }
  func.func @transform_7(%arg0: i32) -> (i32, i32) {
    %c0_i32 = arith.constant 0 : i32
    %c0_i32_0 = arith.constant 0 : i32
    return %arg0, %c0_i32 : i32, i32
  }
}

</mosaic_0001>

<llo_original>
// kernel: dqn_forward.1
$region0: #{dqn_forward.1}
  #allocation0 [shape = 'u32[]', space=smem, size = 0x4, offset = 0x4, fixed_abs, tag = 'smem constant byte address 0x4 - core index']
  #allocation1 [shape = 'u32[144,128]{1,0:T(1,128)}', space=vmem, size = 0x12000, scoped, tag = 'internal scratch']
  %s0 = inlined_call_operand.vmem [shape: f32[8,32], index: 0, kind: input, shape index: {}]
  %s1 = inlined_call_operand.hbm [shape: f32[32,128], index: 1, kind: input, shape index: {}]
  %s2 = inlined_call_operand.vmem [shape: f32[1,128], index: 2, kind: input, shape index: {}]
  %s3 = inlined_call_operand.hbm [shape: f32[128,128], index: 3, kind: input, shape index: {}]
  %s4 = inlined_call_operand.vmem [shape: f32[1,128], index: 4, kind: input, shape index: {}]
  %s5 = inlined_call_operand.hbm [shape: f32[128,128], index: 5, kind: input, shape index: {}]
  %s6 = inlined_call_operand.vmem [shape: f32[1,128], index: 6, kind: input, shape index: {}]
  %s7 = inlined_call_operand.vmem [shape: f32[8,128], index: 7, kind: output, shape index: {}]
  %s8 = sld [smem:[#allocation0]]
  $region50: #{dqn_forward.1} parent=0
    _
  %s10 = ssub.s32 1, %s8
  %s11 = scalar_select 0, %s10, %s8
  $region1: #{dqn_forward.1} parent=0
    #allocation2 [shape = 'u8[16384]{0}', space=vmem, size = 0x4000, scoped, tag = 'input window, operand 1, single buffered']
    #allocation3 [shape = 's32[1]{0}', space=sflag, size = 0x4, scoped, tag = 'scoped memory for dqn_forward.1']
    #allocation4 [shape = 'u8[65536]{0}', space=vmem, size = 0x10000, scoped, tag = 'input window, operand 3, single buffered']
    #allocation5 [shape = 's32[1]{0}', space=sflag, size = 0x4, scoped, tag = 'scoped memory for dqn_forward.1']
    #allocation6 [shape = 'u8[65536]{0}', space=vmem, size = 0x10000, scoped, tag = 'input window, operand 5, single buffered']
    %12 = vsyncpa [#allocation3], 0
    %13 = vsyncpa [#allocation5], 0
    // Predicated region
    $region2: #{dqn_forward.1} parent=1 // pred_check
      _
    $region3: #{dqn_forward.1} parent=1 // pred_check_branch
      %15 = sbr.rel (0) target = $region5
    $region4: #{dqn_forward.1} parent=1 // pred_region
      _
    $region5: #{dqn_forward.1} parent=1 // pred_fallthru
      _
    // Predicated region
    $region6: #{dqn_forward.1} parent=1 // pred_check
      _
    $region7: #{dqn_forward.1} parent=1 // pred_check_branch
      %17 = sbr.rel (0) target = $region9
    $region8: #{dqn_forward.1} parent=1 // pred_region
      %s19 = ssub.s32 512, 512
      %20 = vsyncadd [#allocation3], %s19
      %s21 = sshll.u32 [#allocation2], 4
      %s22 = int_to_ptr.vmem [resolvable:$true] %s21
      %27 = dma.hbm_to_vmem [thread:$0]  %s1, 512, %s22, [#allocation3], 128, 128, 8
    $region9: #{dqn_forward.1} parent=1 // pred_fallthru
      _
    // Predicated region
    $region10: #{dqn_forward.1} parent=1 // pred_check
      _
    $region11: #{dqn_forward.1} parent=1 // pred_check_branch
      %29 = sbr.rel (0) target = $region13
    $region12: #{dqn_forward.1} parent=1 // pred_region
      _
    $region13: #{dqn_forward.1} parent=1 // pred_fallthru
      _
    // Predicated region
    $region14: #{dqn_forward.1} parent=1 // pred_check
      _
    $region15: #{dqn_forward.1} parent=1 // pred_check_branch
      %31 = sbr.rel (0) target = $region17
    $region16: #{dqn_forward.1} parent=1 // pred_region
      %s33 = ssub.s32 2048, 2048
      %34 = vsyncadd [#allocation5], %s33
      %s35 = sshll.u32 [#allocation4], 4
      %s36 = int_to_ptr.vmem [resolvable:$true] %s35
      %41 = dma.hbm_to_vmem [thread:$0]  %s3, 2048, %s36, [#allocation5], 128, 128, 8
    $region17: #{dqn_forward.1} parent=1 // pred_fallthru
      _
    // Predicated region
    $region18: #{dqn_forward.1} parent=1 // pred_check
      _
    $region19: #{dqn_forward.1} parent=1 // pred_check_branch
      %43 = sbr.rel (0) target = $region21
    $region20: #{dqn_forward.1} parent=1 // pred_region
      _
    $region21: #{dqn_forward.1} parent=1 // pred_fallthru
      _
    // Predicated region
    $region22: #{dqn_forward.1} parent=1 // pred_check
      _
    $region23: #{dqn_forward.1} parent=1 // pred_check_branch
      %45 = sbr.rel (0) target = $region25
    $region24: #{dqn_forward.1} parent=1 // pred_region
      %s47 = ssub.s32 2048, 2048
      %48 = vsyncadd [#allocation5], %s47
      %s49 = sshll.u32 [#allocation6], 4
      %s50 = int_to_ptr.vmem [resolvable:$true] %s49
      %55 = dma.hbm_to_vmem [thread:$0]  %s5, 2048, %s50, [#allocation5], 128, 128, 8
    $region25: #{dqn_forward.1} parent=1 // pred_fallthru
      _
    // Predicated region
    $region26: #{dqn_forward.1} parent=1 // pred_check
      _
    $region27: #{dqn_forward.1} parent=1 // pred_check_branch
      %57 = sbr.rel (0) target = $region29
    $region28: #{dqn_forward.1} parent=1 // pred_region
      _
    $region29: #{dqn_forward.1} parent=1 // pred_fallthru
      _
    // Predicated region
    $region30: #{dqn_forward.1} parent=1 // pred_check
      _
    $region31: #{dqn_forward.1} parent=1 // pred_check_branch
      %59 = sbr.rel (0) target = $region33
    $region32: #{dqn_forward.1} parent=1 // pred_region
      %60 = dma.done [#allocation3], 512
    $region33: #{dqn_forward.1} parent=1 // pred_fallthru
      _
    // Predicated region
    $region34: #{dqn_forward.1} parent=1 // pred_check
      _
    $region35: #{dqn_forward.1} parent=1 // pred_check_branch
      %62 = sbr.rel (0) target = $region37
    $region36: #{dqn_forward.1} parent=1 // pred_region
      %63 = dma.done [#allocation5], 2048
    $region37: #{dqn_forward.1} parent=1 // pred_fallthru
      _
    // Predicated region
    $region38: #{dqn_forward.1} parent=1 // pred_check
      _
    $region39: #{dqn_forward.1} parent=1 // pred_check_branch
      %65 = sbr.rel (0) target = $region41
    $region40: #{dqn_forward.1} parent=1 // pred_region
      %66 = dma.done [#allocation5], 2048
    $region41: #{dqn_forward.1} parent=1 // pred_fallthru
      _
    %v67 = vld [vmem:[%s0] sm:$0xff]
    %v68 = vld [vmem:[#allocation2] sm:$0xff]
    %v69 = vld [vmem:[#allocation2 + $0x8] sm:$0xff]
    %v70 = vld [vmem:[#allocation2 + $0x10] sm:$0xff]
    %v71 = vld [vmem:[#allocation2 + $0x18] sm:$0xff]
    %v72 = vld [vmem:[%s2] sm:$0x1]
    %v74 = vlaneseq
    %v75 = vshrl.u32 %v74, 7
    %v76 = vsub.s32 0, %v75
    %v77 = vrot.slane %v72, %v76
    %vm79 = vcmask 261120
    %v81 = vsel %vm79, %v67, 0
    %83 = vmatprep.subr.mxu0 0.0
    %84 = vmatpush1.msra.mxu0 %v68
    %85 = vmatprep.subr.mxu0 0.0
    %86 = vmatpush1.msra.mxu0 %v69
    %87 = vmatprep.subr.mxu0 0.0
    %88 = vmatpush1.msra.mxu0 %v70
    %89 = vmatprep.subr.mxu0 0.0
    %90 = vmatpush1.msra.mxu0 %v71
    %91 = vmatprep.subr.mxu0 0.0
    %92 = vmatpush1.msra.mxu0 0.0
    %93 = vmatprep.subr.mxu0 0.0
    %94 = vmatpush1.msra.mxu0 0.0
    %95 = vmatprep.subr.mxu0 0.0
    %96 = vmatpush1.msra.mxu0 0.0
    %97 = vmatprep.subr.mxu0 0.0
    %98 = vmatpush1.msra.mxu0 0.0
    %99 = vmatprep.subr.mxu0 0.0
    %100 = vmatpush1.msra.mxu0 0.0
    %101 = vmatprep.subr.mxu0 0.0
    %102 = vmatpush1.msra.mxu0 0.0
    %103 = vmatprep.subr.mxu0 0.0
    %104 = vmatpush1.msra.mxu0 0.0
    %105 = vmatprep.subr.mxu0 0.0
    %106 = vmatpush1.msra.mxu0 0.0
    %107 = vmatprep.subr.mxu0 0.0
    %108 = vmatpush1.msra.mxu0 0.0
    %109 = vmatprep.subr.mxu0 0.0
    %110 = vmatpush1.msra.mxu0 0.0
    %111 = vmatprep.subr.mxu0 0.0
    %112 = vmatpush1.msra.mxu0 0.0
    %113 = vmatprep.subr.mxu0 0.0
    %114 = vmatpush1.msra.mxu0 0.0
    %115 = vmatprep.subr.mxu0 0.0
    %116 = vmatpush1.msra.mxu0 0.0
    %117 = vmatprep.subr.mxu0 0.0
    %118 = vmatpush1.msra.mxu0 0.0
    %119 = vmatprep.subr.mxu0 0.0
    %120 = vmatpush1.msra.mxu0 0.0
    %121 = vmatprep.subr.mxu0 0.0
    %122 = vmatpush1.msra.mxu0 0.0
    %123 = vmatprep.subr.mxu0 0.0
    %124 = vmatpush1.msra.mxu0 0.0
    %125 = vmatprep.subr.mxu0 0.0
    %126 = vmatpush1.msra.mxu0 0.0
    %127 = vmatprep.subr.mxu0 0.0
    %128 = vmatpush1.msra.mxu0 0.0
    %129 = vmatprep.subr.mxu0 0.0
    %130 = vmatpush1.msra.mxu0 0.0
    %131 = vmatprep.subr.mxu0 0.0
    %132 = vmatpush1.msra.mxu0 0.0
    %133 = vmatprep.subr.mxu0 0.0
    %134 = vmatpush1.msra.mxu0 0.0
    %135 = vmatprep.subr.mxu0 0.0
    %136 = vmatpush1.msra.mxu0 0.0
    %137 = vmatprep.subr.mxu0 0.0
    %138 = vmatpush1.msra.mxu0 0.0
    %139 = vmatprep.subr.mxu0 0.0
    %140 = vmatpush1.msra.mxu0 0.0
    %141 = vmatprep.subr.mxu0 0.0
    %142 = vmatpush1.msra.mxu0 0.0
    %143 = vmatprep.subr.mxu0 0.0
    %144 = vmatpush1.msra.mxu0 0.0
    %145 = vmatprep.subr.mxu0 0.0
    %146 = vmatpush1.msra.mxu0 0.0
    %147 = vmatprep.mubr.f32.mxu0 0.0
    %148 = vmatmul.mubr.f32.gmra.mrb[0].mxu0 %v81
    %v149 = vpop.f32.mrb[0].mxu0
    %v150 = vadd.f32 %v77, %v149
    %v151 = vpop.f32.mrb[0].mxu0
    %152 = vdwg.mxu0
    %v153 = vmax.f32 %v150, 0.0
    %v154 = vld [vmem:[#allocation4] sm:$0xff]
    %v155 = vld [vmem:[#allocation4 + $0x8] sm:$0xff]
    %v156 = vld [vmem:[#allocation4 + $0x10] sm:$0xff]
    %v157 = vld [vmem:[#allocation4 + $0x18] sm:$0xff]
    %v158 = vld [vmem:[#allocation4 + $0x20] sm:$0xff]
    %v159 = vld [vmem:[#allocation4 + $0x28] sm:$0xff]
    %v160 = vld [vmem:[#allocation4 + $0x30] sm:$0xff]
    %v161 = vld [vmem:[#allocation4 + $0x38] sm:$0xff]
    %v162 = vld [vmem:[#allocation4 + $0x40] sm:$0xff]
    %v163 = vld [vmem:[#allocation4 + $0x48] sm:$0xff]
    %v164 = vld [vmem:[#allocation4 + $0x50] sm:$0xff]
    %v165 = vld [vmem:[#allocation4 + $0x58] sm:$0xff]
    %v166 = vld [vmem:[#allocation4 + $0x60] sm:$0xff]
    %v167 = vld [vmem:[#allocation4 + $0x68] sm:$0xff]
    %v168 = vld [vmem:[#allocation4 + $0x70] sm:$0xff]
    %v169 = vld [vmem:[#allocation4 + $0x78] sm:$0xff]
    %v170 = vld [vmem:[%s4] sm:$0x1]
    %v172 = vlaneseq
    %v173 = vshrl.u32 %v172, 7
    %v174 = vsub.s32 0, %v173
    %v175 = vrot.slane %v170, %v174
    %177 = vmatprep.subr.mxu0 0.0
    %178 = vmatpush1.msra.mxu0 %v154
    %179 = vmatprep.subr.mxu0 0.0
    %180 = vmatpush1.msra.mxu0 %v155
    %181 = vmatprep.subr.mxu0 0.0
    %182 = vmatpush1.msra.mxu0 %v156
    %183 = vmatprep.subr.mxu0 0.0
    %184 = vmatpush1.msra.mxu0 %v157
    %185 = vmatprep.subr.mxu0 0.0
    %186 = vmatpush1.msra.mxu0 %v158
    %187 = vmatprep.subr.mxu0 0.0
    %188 = vmatpush1.msra.mxu0 %v159
    %189 = vmatprep.subr.mxu0 0.0
    %190 = vmatpush1.msra.mxu0 %v160
    %191 = vmatprep.subr.mxu0 0.0
    %192 = vmatpush1.msra.mxu0 %v161
    %193 = vmatprep.subr.mxu0 0.0
    %194 = vmatpush1.msra.mxu0 %v162
    %195 = vmatprep.subr.mxu0 0.0
    %196 = vmatpush1.msra.mxu0 %v163
    %197 = vmatprep.subr.mxu0 0.0
    %198 = vmatpush1.msra.mxu0 %v164
    %199 = vmatprep.subr.mxu0 0.0
    %200 = vmatpush1.msra.mxu0 %v165
    %201 = vmatprep.subr.mxu0 0.0
    %202 = vmatpush1.msra.mxu0 %v166
    %203 = vmatprep.subr.mxu0 0.0
    %204 = vmatpush1.msra.mxu0 %v167
    %205 = vmatprep.subr.mxu0 0.0
    %206 = vmatpush1.msra.mxu0 %v168
    %207 = vmatprep.subr.mxu0 0.0
    %208 = vmatpush1.msra.mxu0 %v169
    %209 = vmatprep.subr.mxu0 0.0
    %210 = vmatpush1.msra.mxu0 0.0
    %211 = vmatprep.subr.mxu0 0.0
    %212 = vmatpush1.msra.mxu0 0.0
    %213 = vmatprep.subr.mxu0 0.0
    %214 = vmatpush1.msra.mxu0 0.0
    %215 = vmatprep.subr.mxu0 0.0
    %216 = vmatpush1.msra.mxu0 0.0
    %217 = vmatprep.subr.mxu0 0.0
    %218 = vmatpush1.msra.mxu0 0.0
    %219 = vmatprep.subr.mxu0 0.0
    %220 = vmatpush1.msra.mxu0 0.0
    %221 = vmatprep.subr.mxu0 0.0
    %222 = vmatpush1.msra.mxu0 0.0
    %223 = vmatprep.subr.mxu0 0.0
    %224 = vmatpush1.msra.mxu0 0.0
    %225 = vmatprep.subr.mxu0 0.0
    %226 = vmatpush1.msra.mxu0 0.0
    %227 = vmatprep.subr.mxu0 0.0
    %228 = vmatpush1.msra.mxu0 0.0
    %229 = vmatprep.subr.mxu0 0.0
    %230 = vmatpush1.msra.mxu0 0.0
    %231 = vmatprep.subr.mxu0 0.0
    %232 = vmatpush1.msra.mxu0 0.0
    %233 = vmatprep.subr.mxu0 0.0
    %234 = vmatpush1.msra.mxu0 0.0
    %235 = vmatprep.subr.mxu0 0.0
    %236 = vmatpush1.msra.mxu0 0.0
    %237 = vmatprep.subr.mxu0 0.0
    %238 = vmatpush1.msra.mxu0 0.0
    %239 = vmatprep.subr.mxu0 0.0
    %240 = vmatpush1.msra.mxu0 0.0
    %241 = vmatprep.mubr.f32.mxu0 0.0
    %242 = vmatmul.mubr.f32.gmra.mrb[0].mxu0 %v153
    %v243 = vpop.f32.mrb[0].mxu0
    %v244 = vadd.f32 %v175, %v243
    %v245 = vpop.f32.mrb[0].mxu0
    %246 = vdwg.mxu0
    %v247 = vmax.f32 %v244, 0.0
    %v248 = vld [vmem:[#allocation6] sm:$0xff]
    %v249 = vld [vmem:[#allocation6 + $0x8] sm:$0xff]
    %v250 = vld [vmem:[#allocation6 + $0x10] sm:$0xff]
    %v251 = vld [vmem:[#allocation6 + $0x18] sm:$0xff]
    %v252 = vld [vmem:[#allocation6 + $0x20] sm:$0xff]
    %v253 = vld [vmem:[#allocation6 + $0x28] sm:$0xff]
    %v254 = vld [vmem:[#allocation6 + $0x30] sm:$0xff]
    %v255 = vld [vmem:[#allocation6 + $0x38] sm:$0xff]
    %v256 = vld [vmem:[#allocation6 + $0x40] sm:$0xff]
    %v257 = vld [vmem:[#allocation6 + $0x48] sm:$0xff]
    %v258 = vld [vmem:[#allocation6 + $0x50] sm:$0xff]
    %v259 = vld [vmem:[#allocation6 + $0x58] sm:$0xff]
    %v260 = vld [vmem:[#allocation6 + $0x60] sm:$0xff]
    %v261 = vld [vmem:[#allocation6 + $0x68] sm:$0xff]
    %v262 = vld [vmem:[#allocation6 + $0x70] sm:$0xff]
    %v263 = vld [vmem:[#allocation6 + $0x78] sm:$0xff]
    %v264 = vld [vmem:[%s6] sm:$0x1]
    %v266 = vlaneseq
    %v267 = vshrl.u32 %v266, 7
    %v268 = vsub.s32 0, %v267
    %v269 = vrot.slane %v264, %v268
    %271 = vmatprep.subr.mxu0 0.0
    %272 = vmatpush1.msra.mxu0 %v248
    %273 = vmatprep.subr.mxu0 0.0
    %274 = vmatpush1.msra.mxu0 %v249
    %275 = vmatprep.subr.mxu0 0.0
    %276 = vmatpush1.msra.mxu0 %v250
    %277 = vmatprep.subr.mxu0 0.0
    %278 = vmatpush1.msra.mxu0 %v251
    %279 = vmatprep.subr.mxu0 0.0
    %280 = vmatpush1.msra.mxu0 %v252
    %281 = vmatprep.subr.mxu0 0.0
    %282 = vmatpush1.msra.mxu0 %v253
    %283 = vmatprep.subr.mxu0 0.0
    %284 = vmatpush1.msra.mxu0 %v254
    %285 = vmatprep.subr.mxu0 0.0
    %286 = vmatpush1.msra.mxu0 %v255
    %287 = vmatprep.subr.mxu0 0.0
    %288 = vmatpush1.msra.mxu0 %v256
    %289 = vmatprep.subr.mxu0 0.0
    %290 = vmatpush1.msra.mxu0 %v257
    %291 = vmatprep.subr.mxu0 0.0
    %292 = vmatpush1.msra.mxu0 %v258
    %293 = vmatprep.subr.mxu0 0.0
    %294 = vmatpush1.msra.mxu0 %v259
    %295 = vmatprep.subr.mxu0 0.0
    %296 = vmatpush1.msra.mxu0 %v260
    %297 = vmatprep.subr.mxu0 0.0
    %298 = vmatpush1.msra.mxu0 %v261
    %299 = vmatprep.subr.mxu0 0.0
    %300 = vmatpush1.msra.mxu0 %v262
    %301 = vmatprep.subr.mxu0 0.0
    %302 = vmatpush1.msra.mxu0 %v263
    %303 = vmatprep.subr.mxu0 0.0
    %304 = vmatpush1.msra.mxu0 0.0
    %305 = vmatprep.subr.mxu0 0.0
    %306 = vmatpush1.msra.mxu0 0.0
    %307 = vmatprep.subr.mxu0 0.0
    %308 = vmatpush1.msra.mxu0 0.0
    %309 = vmatprep.subr.mxu0 0.0
    %310 = vmatpush1.msra.mxu0 0.0
    %311 = vmatprep.subr.mxu0 0.0
    %312 = vmatpush1.msra.mxu0 0.0
    %313 = vmatprep.subr.mxu0 0.0
    %314 = vmatpush1.msra.mxu0 0.0
    %315 = vmatprep.subr.mxu0 0.0
    %316 = vmatpush1.msra.mxu0 0.0
    %317 = vmatprep.subr.mxu0 0.0
    %318 = vmatpush1.msra.mxu0 0.0
    %319 = vmatprep.subr.mxu0 0.0
    %320 = vmatpush1.msra.mxu0 0.0
    %321 = vmatprep.subr.mxu0 0.0
    %322 = vmatpush1.msra.mxu0 0.0
    %323 = vmatprep.subr.mxu0 0.0
    %324 = vmatpush1.msra.mxu0 0.0
    %325 = vmatprep.subr.mxu0 0.0
    %326 = vmatpush1.msra.mxu0 0.0
    %327 = vmatprep.subr.mxu0 0.0
    %328 = vmatpush1.msra.mxu0 0.0
    %329 = vmatprep.subr.mxu0 0.0
    %330 = vmatpush1.msra.mxu0 0.0
    %331 = vmatprep.subr.mxu0 0.0
    %332 = vmatpush1.msra.mxu0 0.0
    %333 = vmatprep.subr.mxu0 0.0
    %334 = vmatpush1.msra.mxu0 0.0
    %335 = vmatprep.mubr.f32.mxu0 0.0
    %336 = vmatmul.mubr.f32.gmra.mrb[0].mxu0 %v247
    %v337 = vpop.f32.mrb[0].mxu0
    %v338 = vadd.f32 %v269, %v337
    %v339 = vpop.f32.mrb[0].mxu0
    %340 = vdwg.mxu0
    %341 = vst [vmem:[%s7] sm:$0xff] %v338
    // Predicated region
    $region42: #{dqn_forward.1} parent=1 // pred_check
      _
    $region43: #{dqn_forward.1} parent=1 // pred_check_branch
      %343 = sbr.rel (0) target = $region45
    $region44: #{dqn_forward.1} parent=1 // pred_region
      _
    $region45: #{dqn_forward.1} parent=1 // pred_fallthru
      _
    // Predicated region
    $region46: #{dqn_forward.1} parent=1 // pred_check
      _
    $region47: #{dqn_forward.1} parent=1 // pred_check_branch
      %345 = sbr.rel (0) target = $region49
    $region48: #{dqn_forward.1} parent=1 // pred_region
      _
    $region49: #{dqn_forward.1} parent=1 // pred_fallthru
      _
    %346 = vsyncpa [#allocation3], 1
    %347 = vsyncpa [#allocation5], 1

</llo_original>
